<compile_context>
chip_gen: v7x
topology: tpu7x:2x2x1
jax: 0.10.0
libtpu: 0.0.40
codegen_flags: <defaults>
</compile_context>

<pallas_src>
import functools
from typing import NamedTuple

import jax
import jax.numpy as jnp
from jax.experimental import pallas as pl
from jax.experimental.pallas import tpu as pltpu

_LANE = 128
_MAX_TILE_B = 1024                      # upper bound on rows per grid step
_VMEM_FRACTION = 0.75                   # fraction of physical VMEM handed to the kernel
_SIZING_FRACTION = 0.85                 # extra headroom for compiler internals when sizing tiles
_FALLBACK_VMEM_CAP = 64 * 1024 * 1024   # if get_tpu_info() is unavailable (safe on all gens)

_TPU_INFO_CACHE = {}


def _round_up(x, m):
    return (x + m - 1) // m * m


def _cdiv(a, b):
    return -(-a // b)


def _pad_to(a, shape):
    """Zero-pad `a` (trailing side) up to `shape`."""
    pads = [(0, t - s) for s, t in zip(a.shape, shape)]
    if all(p == (0, 0) for p in pads):
        return a
    return jnp.pad(a, pads)   # zeros: keeps the MLP math identical through ReLU


def _vmem_limit_bytes():
    """~75% of this generation's physical VMEM (96 MiB v5e/v6e, 48 MiB v7x)."""
    if "vmem" not in _TPU_INFO_CACHE:
        try:
            cap = int(getattr(pltpu.get_tpu_info(), "vmem_capacity_bytes", 0)) or _FALLBACK_VMEM_CAP
        except Exception:
            cap = _FALLBACK_VMEM_CAP
        _TPU_INFO_CACHE["vmem"] = int(_VMEM_FRACTION * cap)
    return _TPU_INFO_CACHE["vmem"]


def _num_tensorcores():
    """Best-effort TensorCore count (2 on v7x megacore, 1 on v5e/v6e)."""
    if "cores" not in _TPU_INFO_CACHE:
        cores = 1
        try:
            info = pltpu.get_tpu_info()
            for name in ("num_cores", "core_count", "num_tensorcores", "tensorcores_per_chip"):
                v = getattr(info, name, None)
                if isinstance(v, int) and v >= 1:
                    cores = v
                    break
        except Exception:
            pass
        _TPU_INFO_CACHE["cores"] = cores
    return _TPU_INFO_CACHE["cores"]


class PreparedParams(NamedTuple):
    w1: jax.Array
    b1: jax.Array
    w2: jax.Array
    b2: jax.Array
    w3: jax.Array
    b3: jax.Array
    d_out: int       # original (unpadded) output feature count


def prepare_params(params, *, operand_dtype=None):
    """Pad hidden/output feature dims to multiples of 128 and cast weights to the
    MXU operand dtype ONCE (instead of per forward call).  Padding is exact zeros,
    so the math is unchanged through ReLU; padded output columns are sliced off
    after the kernel.  Biases stay f32 (accumulation / bias-add / ReLU are f32)."""
    w1, b1, w2, b2, w3, b3 = (jnp.asarray(a) for a in params)
    op_dtype = jnp.dtype(operand_dtype) if operand_dtype is not None else w1.dtype
    d_in, d_h1 = w1.shape
    d_h2 = w2.shape[1]
    d_out = w3.shape[1]
    d_h1_p, d_h2_p, d_out_p = (_round_up(d, _LANE) for d in (d_h1, d_h2, d_out))
    return PreparedParams(
        _pad_to(w1, (d_in, d_h1_p)).astype(op_dtype),
        _pad_to(b1.reshape(1, -1), (1, d_h1_p)).astype(jnp.float32),
        _pad_to(w2, (d_h1_p, d_h2_p)).astype(op_dtype),
        _pad_to(b2.reshape(1, -1), (1, d_h2_p)).astype(jnp.float32),
        _pad_to(w3, (d_h2_p, d_out_p)).astype(op_dtype),
        _pad_to(b3.reshape(1, -1), (1, d_out_p)).astype(jnp.float32),
        int(d_out),
    )


# ----------------------------------------------------------------------------
# Fused single-kernel path: all three layers on one batch tile, weights resident.
# ----------------------------------------------------------------------------
def _fused_mlp_kernel(x_ref, w1_ref, b1_ref, w2_ref, b2_ref, w3_ref, b3_ref, o_ref):
    cdt = w1_ref.dtype                        # MXU operand dtype (f32 or bf16)
    x = x_ref[...].astype(cdt)                # in-kernel cast: no extra wrapper HBM pass
    h1 = jnp.dot(x, w1_ref[...], preferred_element_type=jnp.float32) + b1_ref[...]
    h1 = jnp.maximum(h1, 0.0).astype(cdt)
    h2 = jnp.dot(h1, w2_ref[...], preferred_element_type=jnp.float32) + b2_ref[...]
    h2 = jnp.maximum(h2, 0.0).astype(cdt)
    out = jnp.dot(h2, w3_ref[...], preferred_element_type=jnp.float32) + b3_ref[...]
    o_ref[...] = out.astype(o_ref.dtype)      # lane-dense store (d_out padded to 128)


def _fused_vmem_bytes(t, d_in, d_h1_p, d_h2_p, d_out_p,
                      x_bytes, op_bytes, out_bytes, weight_bytes):
    """VMEM high-water estimate for one batch tile of `t` rows."""
    io = 2 * t * d_in * x_bytes + 2 * t * d_out_p * out_bytes    # double-buffered x / out tiles
    cast_x = t * d_in * op_bytes if op_bytes != x_bytes else 0   # in-kernel operand cast of x
    inter = 4 * t * (d_h1_p + d_h2_p)                            # f32 h1 / h2
    if op_bytes < 4:
        inter += op_bytes * t * (d_h1_p + d_h2_p)                # bf16 copies fed to next matmul
    inter += 4 * t * d_out_p                                     # pre-store f32 out tile
    return io + weight_bytes + cast_x + inter                    # weights single-buffered


# ----------------------------------------------------------------------------
# Layered fallback path (feature-axis tiling): per-layer (M, N, K)-tiled matmul.
# ----------------------------------------------------------------------------
def _linear_kernel(x_ref, w_ref, b_ref, o_ref, acc_ref, *, apply_relu):
    k = pl.program_id(2)

    @pl.when(k == 0)
    def _():
        acc_ref[...] = jnp.zeros_like(acc_ref)

    acc_ref[...] += jnp.dot(x_ref[...].astype(w_ref.dtype), w_ref[...],
                            preferred_element_type=jnp.float32)

    @pl.when(k == pl.num_programs(2) - 1)
    def _():
        out = acc_ref[...] + b_ref[...]
        if apply_relu:
            out = jnp.maximum(out, 0.0)
        o_ref[...] = out.astype(o_ref.dtype)


def _linear(x, w, b, *, apply_relu, tm, tn, tk, out_dtype, vmem_limit):
    M, K = x.shape
    N = w.shape[1]
    grid = (M // tm, N // tn, _cdiv(K, tk))
    return pl.pallas_call(
        functools.partial(_linear_kernel, apply_relu=apply_relu),
        out_shape=jax.ShapeDtypeStruct((M, N), out_dtype),
        grid_spec=pltpu.PrefetchScalarGridSpec(
            num_scalar_prefetch=0,
            grid=grid,
            in_specs=[
                pl.BlockSpec((tm, tk), lambda i, j, k: (i, k)),
                pl.BlockSpec((tk, tn), lambda i, j, k: (k, j)),
                pl.BlockSpec((1, tn), lambda i, j, k: (0, j)),
            ],
            out_specs=pl.BlockSpec((tm, tn), lambda i, j, k: (i, j)),
            scratch_shapes=[pltpu.VMEM((tm, tn), jnp.float32)],
        ),
        compiler_params=pltpu.CompilerParams(
            dimension_semantics=("parallel", "parallel", "arbitrary"),
            vmem_limit_bytes=vmem_limit,
        ),
    )(x, w, b)


def _layered_forward(x2d, prep, out_dtype, vmem_limit, sublane, n_tc):
    op_dtype = prep.w1.dtype
    op_bytes = jnp.dtype(op_dtype).itemsize
    layers = ((prep.w1, prep.b1, True), (prep.w2, prep.b2, True), (prep.w3, prep.b3, False))

    def tile_kn(K, N):
        tn = next(c for c in (512, 256, 128) if N % c == 0)
        tk = next((c for c in (512, 256, 128) if K % c == 0), K)   # un-tileable K -> full K
        return tk, tn

    tiles = [tile_kn(*w.shape) for w, _, _ in layers]
    in_bytes = [jnp.dtype(x2d.dtype).itemsize, op_bytes, op_bytes]
    out_bytes = [op_bytes, op_bytes, jnp.dtype(out_dtype).itemsize]

    def layer_vmem(t, li):
        tk, tn = tiles[li]
        return (2 * t * tk * in_bytes[li]       # input tile (double-buffered)
                + 2 * tk * tn * op_bytes        # weight tile
                + 2 * tn * 4                    # bias tile
                + 2 * t * tn * out_bytes[li]    # output tile
                + 4 * t * tn                    # f32 accumulator scratch
                + t * tk * op_bytes)            # in-kernel cast copy of the input tile

    size_budget = int(_SIZING_FRACTION * vmem_limit)
    B = x2d.shape[0]
    b_sub = _round_up(B, sublane)
    tm = min(_MAX_TILE_B, b_sub)
    while tm > sublane and max(layer_vmem(tm, li) for li in range(3)) > size_budget:
        tm -= sublane
    # TODO(synk): if even tm == sublane exceeds the budget (enormous un-tileable
    # d_in), additionally split the first layer's K reduction by hand.
    steps = _cdiv(b_sub, tm)
    tm = _round_up(_cdiv(b_sub, steps), sublane)        # near-equal batch split
    steps = _cdiv(b_sub, tm)
    if n_tc > 1 and steps > 1:
        steps = _round_up(steps, n_tc)                  # even step count across TCs
    m_pad = steps * tm

    h = x2d if m_pad == B else _pad_to(x2d, (m_pad, x2d.shape[1]))
    for li, (w, b, relu) in enumerate(layers):
        tk, tn = tiles[li]
        o_dt = out_dtype if li == 2 else op_dtype
        h = _linear(h, w, b, apply_relu=relu, tm=tm, tn=tn, tk=tk,
                    out_dtype=o_dt, vmem_limit=vmem_limit)
    return h[:B, :prep.d_out]


# ----------------------------------------------------------------------------
# Public forward.
# ----------------------------------------------------------------------------
def mlp_forward(x, params, *, tile_b=None, operand_dtype=None, force_layered=False):
    """relu(relu(x.view(-1, D_in) @ W1 + b1) @ W2 + b2) @ W3 + b3.

    `params` may be the raw (w1, b1, w2, b2, w3, b3) tuple (weights stored as
    (in, out), the transpose of PyTorch's (out, in)) or a PreparedParams from
    prepare_params() — preferred, so padding/casting happens only once.
    `operand_dtype` (e.g. jnp.bfloat16) only applies when raw params are given;
    accumulation / bias / ReLU stay f32 and the output keeps x's dtype.
    """
    prep = params if isinstance(params, PreparedParams) else prepare_params(
        params, operand_dtype=operand_dtype)

    out_dtype = x.dtype
    d_in = prep.w1.shape[0]
    d_h1_p, d_h2_p, d_out_p = prep.w1.shape[1], prep.w2.shape[1], prep.w3.shape[1]

    x2d = x.reshape(-1, d_in)
    B = x2d.shape[0]

    x_bytes = jnp.dtype(x2d.dtype).itemsize
    op_bytes = jnp.dtype(prep.w1.dtype).itemsize
    out_bytes = jnp.dtype(out_dtype).itemsize
    sublane = max(8, 32 // min(x_bytes, out_bytes))     # 8 for f32 tiles, 16 for bf16

    vmem_limit = _vmem_limit_bytes()
    size_budget = int(_SIZING_FRACTION * vmem_limit)
    n_tc = _num_tensorcores()

    weight_bytes = sum(int(a.size) * a.dtype.itemsize for a in prep[:6])

    def fits(t):
        return _fused_vmem_bytes(t, d_in, d_h1_p, d_h2_p, d_out_p,
                                 x_bytes, op_bytes, out_bytes, weight_bytes) <= size_budget

    if force_layered or not fits(sublane):
        # Feature-axis tiling: weights + intermediates don't fit the VMEM budget.
        return _layered_forward(x2d, prep, out_dtype, vmem_limit, sublane, n_tc)

    # ---- fused path: batch-only grid, weights resident (single-buffered). ----
    b_sub = _round_up(B, sublane)
    if tile_b is None:
        max_fit = min(_MAX_TILE_B, b_sub)
        while max_fit > sublane and not fits(max_fit):
            max_fit -= sublane
        num_steps = _cdiv(b_sub, max_fit)
        # Only split a batch that already fits in one tile when there are
        # multiple TensorCores AND each piece still keeps the 256-wide MXU busy.
        if num_steps == 1 and n_tc > 1 and b_sub >= n_tc * 256:
            num_steps = n_tc
        tile_b = _round_up(_cdiv(b_sub, num_steps), sublane)   # near-equal split
    else:
        tile_b = max(sublane, _round_up(tile_b, sublane))
    num_steps = _cdiv(b_sub, tile_b)
    if n_tc > 1 and num_steps > 1:
        num_steps = _round_up(num_steps, n_tc)                 # even steps per TC
    b_pad = num_steps * tile_b

    # No wrapper-side cast; pad batch only when required.
    x2dp = x2d if b_pad == B else _pad_to(x2d, (b_pad, d_in))

    def run(single_buffer_weights):
        def wspec(shape):
            if single_buffer_weights:
                return pl.BlockSpec(shape, lambda i: (0, 0),
                                    pipeline_mode=pl.Buffered(1))
            return pl.BlockSpec(shape, lambda i: (0, 0))

        return pl.pallas_call(
            _fused_mlp_kernel,
            out_shape=jax.ShapeDtypeStruct((b_pad, d_out_p), out_dtype),
            grid_spec=pltpu.PrefetchScalarGridSpec(
                num_scalar_prefetch=0,
                grid=(num_steps,),
                in_specs=[
                    pl.BlockSpec((tile_b, d_in), lambda i: (i, 0)),   # x tile
                    wspec(prep.w1.shape), wspec(prep.b1.shape),       # resident weights/biases
                    wspec(prep.w2.shape), wspec(prep.b2.shape),
                    wspec(prep.w3.shape), wspec(prep.b3.shape),
                ],
                out_specs=pl.BlockSpec((tile_b, d_out_p), lambda i: (i, 0)),  # lane-dense store
            ),
            compiler_params=pltpu.CompilerParams(
                dimension_semantics=("parallel",),
                vmem_limit_bytes=vmem_limit,
            ),
        )(x2dp, prep.w1, prep.b1, prep.w2, prep.b2, prep.w3, prep.b3)

    try:
        out = run(True)     # weights single-buffered (constant block index)
    except Exception:
        out = run(False)    # fallback for Pallas versions without pipeline_mode

    return out[:B, :prep.d_out]


def init_params(key, d_in, d_h1, d_h2, d_out, dtype=jnp.float32):
    """Deterministic init mimicking nn.Linear's uniform(-1/sqrt(fan_in), 1/sqrt(fan_in)).
    Weights are stored as (in, out), i.e. the transpose of PyTorch's (out, in)."""
    keys = jax.random.split(key, 6)

    def lin(kw, kb, fan_in, fan_out):
        bound = 1.0 / jnp.sqrt(jnp.asarray(fan_in, dtype))
        w = jax.random.uniform(kw, (fan_in, fan_out), dtype, -bound, bound)
        b = jax.random.uniform(kb, (1, fan_out), dtype, -bound, bound)
        return w, b

    w1, b1 = lin(keys[0], keys[1], d_in, d_h1)
    w2, b2 = lin(keys[2], keys[3], d_h1, d_h2)
    w3, b3 = lin(keys[4], keys[5], d_h2, d_out)
    return (w1, b1, w2, b2, w3, b3)


if __name__ == "__main__":
    D_in, D_H1, D_H2, D_out = 32, 64, 48, 16
    key = jax.random.PRNGKey(0)
    k_x, k_p = jax.random.split(key)

    # (32, 4, 8) -> .view(-1, 32) gives 32 rows.
    x = jax.random.normal(k_x, (32, 4, 8), dtype=jnp.float32)
    params = init_params(k_p, D_in, D_H1, D_H2, D_out)

    # Pure-JAX reference.
    w1, b1, w2, b2, w3, b3 = params
    xf = x.reshape(-1, D_in)
    h1 = jnp.maximum(xf @ w1 + b1, 0.0)
    h2 = jnp.maximum(h1 @ w2 + b2, 0.0)
    ref = h2 @ w3 + b3

    # Fused path (weights prepared once, f32 operands).
    prep = prepare_params(params)
    out = jax.block_until_ready(mlp_forward(x, prep))
    assert out.shape == (32, D_out)
    assert jnp.allclose(out, ref, atol=1e-5, rtol=1e-5)

    # bf16 MXU-operand path (f32 accumulation / bias / ReLU).
    prep_bf16 = prepare_params(params, operand_dtype=jnp.bfloat16)
    out_bf16 = jax.block_until_ready(mlp_forward(x, prep_bf16))
    assert out_bf16.shape == (32, D_out)
    assert jnp.allclose(out_bf16, ref, atol=1e-1, rtol=1e-1)

    # Feature-axis-tiled per-layer fallback (used automatically for sizes whose
    # resident weights + intermediates exceed the VMEM budget); compile-test it.
    out_layered = jax.block_until_ready(mlp_forward(x, prep, force_layered=True))
    assert out_layered.shape == (32, D_out)
    assert jnp.allclose(out_layered, ref, atol=1e-5, rtol=1e-5)

    print("KERNEL_OK")
</pallas_src>

<mosaic_0001>
module attributes {stable_mosaic.version = 11 : i64} {
  func.func @_fused_mlp_kernel(%arg0: i32, %arg1: memref<32x32xf32, #tpu.memory_space<vmem>>, %arg2: memref<32x128xf32, #tpu.memory_space<vmem>>, %arg3: memref<1x128xf32, #tpu.memory_space<vmem>>, %arg4: memref<128x128xf32, #tpu.memory_space<vmem>>, %arg5: memref<1x128xf32, #tpu.memory_space<vmem>>, %arg6: memref<128x128xf32, #tpu.memory_space<vmem>>, %arg7: memref<1x128xf32, #tpu.memory_space<vmem>>, %arg8: memref<32x128xf32, #tpu.memory_space<vmem>>) attributes {dimension_semantics = [#tpu.dimension_semantics<parallel>], iteration_bounds = array<i64: 1>, scalar_prefetch = 0 : i64, scratch_operands = 0 : i64, tpu.core_type = #tpu.core_type<tc>, window_params = [{transform_indices = @transform_0, window_bounds = array<i64: 32, 32>}, {pipeline_mode = #tpu.pipeline_mode<synchronous>, transform_indices = @transform_1, window_bounds = array<i64: 32, 128>}, {pipeline_mode = #tpu.pipeline_mode<synchronous>, transform_indices = @transform_2, window_bounds = array<i64: 1, 128>}, {pipeline_mode = #tpu.pipeline_mode<synchronous>, transform_indices = @transform_3, window_bounds = array<i64: 128, 128>}, {pipeline_mode = #tpu.pipeline_mode<synchronous>, transform_indices = @transform_4, window_bounds = array<i64: 1, 128>}, {pipeline_mode = #tpu.pipeline_mode<synchronous>, transform_indices = @transform_5, window_bounds = array<i64: 128, 128>}, {pipeline_mode = #tpu.pipeline_mode<synchronous>, transform_indices = @transform_6, window_bounds = array<i64: 1, 128>}, {transform_indices = @transform_7, window_bounds = array<i64: 32, 128>}]} {
    %c0 = arith.constant 0 : index
    %c0_0 = arith.constant 0 : index
    %0 = vector.load %arg1[%c0, %c0_0] : memref<32x32xf32, #tpu.memory_space<vmem>>, vector<32x32xf32>
    %c0_1 = arith.constant 0 : index
    %c0_2 = arith.constant 0 : index
    %1 = vector.load %arg2[%c0_1, %c0_2] : memref<32x128xf32, #tpu.memory_space<vmem>>, vector<32x128xf32>
    %cst = arith.constant dense<0.000000e+00> : vector<32x128xf32>
    %2 = tpu.matmul %0, %1, %cst {dimension_numbers = #tpu.dot_dimension_numbers<[1], [0], [0], [1], [0, 0, 1, 1], [], []>} : vector<32x32xf32>, vector<32x128xf32>, vector<32x128xf32> -> vector<32x128xf32>
    %c0_3 = arith.constant 0 : index
    %c0_4 = arith.constant 0 : index
    %3 = vector.load %arg3[%c0_3, %c0_4] : memref<1x128xf32, #tpu.memory_space<vmem>>, vector<1x128xf32>
    %4 = vector.broadcast %3 : vector<1x128xf32> to vector<32x128xf32>
    %5 = arith.addf %2, %4 : vector<32x128xf32>
    %cst_5 = arith.constant 0.000000e+00 : f32
    %6 = vector.broadcast %cst_5 : f32 to vector<32x128xf32>
    %7 = arith.maximumf %5, %6 : vector<32x128xf32>
    %c0_6 = arith.constant 0 : index
    %c0_7 = arith.constant 0 : index
    %8 = vector.load %arg4[%c0_6, %c0_7] : memref<128x128xf32, #tpu.memory_space<vmem>>, vector<128x128xf32>
    %cst_8 = arith.constant dense<0.000000e+00> : vector<32x128xf32>
    %9 = tpu.matmul %7, %8, %cst_8 {dimension_numbers = #tpu.dot_dimension_numbers<[1], [0], [0], [1], [0, 0, 1, 1], [], []>} : vector<32x128xf32>, vector<128x128xf32>, vector<32x128xf32> -> vector<32x128xf32>
    %c0_9 = arith.constant 0 : index
    %c0_10 = arith.constant 0 : index
    %10 = vector.load %arg5[%c0_9, %c0_10] : memref<1x128xf32, #tpu.memory_space<vmem>>, vector<1x128xf32>
    %11 = vector.broadcast %10 : vector<1x128xf32> to vector<32x128xf32>
    %12 = arith.addf %9, %11 : vector<32x128xf32>
    %cst_11 = arith.constant 0.000000e+00 : f32
    %13 = vector.broadcast %cst_11 : f32 to vector<32x128xf32>
    %14 = arith.maximumf %12, %13 : vector<32x128xf32>
    %c0_12 = arith.constant 0 : index
    %c0_13 = arith.constant 0 : index
    %15 = vector.load %arg6[%c0_12, %c0_13] : memref<128x128xf32, #tpu.memory_space<vmem>>, vector<128x128xf32>
    %cst_14 = arith.constant dense<0.000000e+00> : vector<32x128xf32>
    %16 = tpu.matmul %14, %15, %cst_14 {dimension_numbers = #tpu.dot_dimension_numbers<[1], [0], [0], [1], [0, 0, 1, 1], [], []>} : vector<32x128xf32>, vector<128x128xf32>, vector<32x128xf32> -> vector<32x128xf32>
    %c0_15 = arith.constant 0 : index
    %c0_16 = arith.constant 0 : index
    %17 = vector.load %arg7[%c0_15, %c0_16] : memref<1x128xf32, #tpu.memory_space<vmem>>, vector<1x128xf32>
    %18 = vector.broadcast %17 : vector<1x128xf32> to vector<32x128xf32>
    %19 = arith.addf %16, %18 : vector<32x128xf32>
    %c0_17 = arith.constant 0 : index
    %c0_18 = arith.constant 0 : index
    %20 = vector.load %arg8[%c0_17, %c0_18] : memref<32x128xf32, #tpu.memory_space<vmem>>, vector<32x128xf32>
    tpu.vector_store %arg8[%c0_17, %c0_18], %19 {strides = array<i32>} : memref<32x128xf32, #tpu.memory_space<vmem>>, vector<32x128xf32>,
    return
  }
  func.func @transform_0(%arg0: i32) -> (i32, i32) {
    %c0_i32 = arith.constant 0 : i32
    %c0_i32_0 = arith.constant 0 : i32
    return %arg0, %c0_i32 : i32, i32
  }
  func.func @transform_1(%arg0: i32) -> (i32, i32) {
    %c0_i32 = arith.constant 0 : i32
    %c0_i32_0 = arith.constant 0 : i32
    %c0_i32_1 = arith.constant 0 : i32
    return %c0_i32, %c0_i32_0 : i32, i32
  }
  func.func @transform_2(%arg0: i32) -> (i32, i32) {
    %c0_i32 = arith.constant 0 : i32
    %c0_i32_0 = arith.constant 0 : i32
    %c0_i32_1 = arith.constant 0 : i32
    return %c0_i32, %c0_i32_0 : i32, i32
  }
  func.func @transform_3(%arg0: i32) -> (i32, i32) {
    %c0_i32 = arith.constant 0 : i32
    %c0_i32_0 = arith.constant 0 : i32
    %c0_i32_1 = arith.constant 0 : i32
    return %c0_i32, %c0_i32_0 : i32, i32
  }
  func.func @transform_4(%arg0: i32) -> (i32, i32) {
    %c0_i32 = arith.constant 0 : i32
    %c0_i32_0 = arith.constant 0 : i32
    %c0_i32_1 = arith.constant 0 : i32
    return %c0_i32, %c0_i32_0 : i32, i32
  }
  func.func @transform_5(%arg0: i32) -> (i32, i32) {
    %c0_i32 = arith.constant 0 : i32
    %c0_i32_0 = arith.constant 0 : i32
    %c0_i32_1 = arith.constant 0 : i32
    return %c0_i32, %c0_i32_0 : i32, i32
  }
  func.func @transform_6(%arg0: i32) -> (i32, i32) {
    %c0_i32 = arith.constant 0 : i32
    %c0_i32_0 = arith.constant 0 : i32
    %c0_i32_1 = arith.constant 0 : i32
    return %c0_i32, %c0_i32_0 : i32, i32
  }
  func.func @transform_7(%arg0: i32) -> (i32, i32) {
    %c0_i32 = arith.constant 0 : i32
    %c0_i32_0 = arith.constant 0 : i32
    return %arg0, %c0_i32 : i32, i32
  }
}

module attributes {stable_mosaic.version = 11 : i64} {
  func.func @_fused_mlp_kernel(%arg0: i32, %arg1: memref<32x32xf32, #tpu.memory_space<vmem>>, %arg2: memref<32x128xf32, #tpu.memory_space<vmem>>, %arg3: memref<1x128xf32, #tpu.memory_space<vmem>>, %arg4: memref<128x128xf32, #tpu.memory_space<vmem>>, %arg5: memref<1x128xf32, #tpu.memory_space<vmem>>, %arg6: memref<128x128xf32, #tpu.memory_space<vmem>>, %arg7: memref<1x128xf32, #tpu.memory_space<vmem>>, %arg8: memref<32x128xf32, #tpu.memory_space<vmem>>) attributes {dimension_semantics = [#tpu.dimension_semantics<parallel>], iteration_bounds = array<i64: 1>, scalar_prefetch = 0 : i64, scratch_operands = 0 : i64, tpu.core_type = #tpu.core_type<tc>, window_params = [{transform_indices = @transform_0, window_bounds = array<i64: 32, 32>}, {pipeline_mode = #tpu.pipeline_mode<synchronous>, transform_indices = @transform_1, window_bounds = array<i64: 32, 128>}, {pipeline_mode = #tpu.pipeline_mode<synchronous>, transform_indices = @transform_2, window_bounds = array<i64: 1, 128>}, {pipeline_mode = #tpu.pipeline_mode<synchronous>, transform_indices = @transform_3, window_bounds = array<i64: 128, 128>}, {pipeline_mode = #tpu.pipeline_mode<synchronous>, transform_indices = @transform_4, window_bounds = array<i64: 1, 128>}, {pipeline_mode = #tpu.pipeline_mode<synchronous>, transform_indices = @transform_5, window_bounds = array<i64: 128, 128>}, {pipeline_mode = #tpu.pipeline_mode<synchronous>, transform_indices = @transform_6, window_bounds = array<i64: 1, 128>}, {transform_indices = @transform_7, window_bounds = array<i64: 32, 128>}]} {
    %c0 = arith.constant 0 : index
    %c0_0 = arith.constant 0 : index
    %0 = vector.load %arg1[%c0, %c0_0] : memref<32x32xf32, #tpu.memory_space<vmem>>, vector<32x32xf32>
    %c0_1 = arith.constant 0 : index
    %c0_2 = arith.constant 0 : index
    %1 = vector.load %arg2[%c0_1, %c0_2] : memref<32x128xf32, #tpu.memory_space<vmem>>, vector<32x128xf32>
    %cst = arith.constant dense<0.000000e+00> : vector<32x128xf32>
    %2 = tpu.matmul %0, %1, %cst {dimension_numbers = #tpu.dot_dimension_numbers<[1], [0], [0], [1], [0, 0, 1, 1], [], []>} : vector<32x32xf32>, vector<32x128xf32>, vector<32x128xf32> -> vector<32x128xf32>
    %c0_3 = arith.constant 0 : index
    %c0_4 = arith.constant 0 : index
    %3 = vector.load %arg3[%c0_3, %c0_4] : memref<1x128xf32, #tpu.memory_space<vmem>>, vector<1x128xf32>
    %4 = vector.broadcast %3 : vector<1x128xf32> to vector<32x128xf32>
    %5 = arith.addf %2, %4 : vector<32x128xf32>
    %cst_5 = arith.constant 0.000000e+00 : f32
    %6 = vector.broadcast %cst_5 : f32 to vector<32x128xf32>
    %7 = arith.maximumf %5, %6 : vector<32x128xf32>
    %c0_6 = arith.constant 0 : index
    %c0_7 = arith.constant 0 : index
    %8 = vector.load %arg4[%c0_6, %c0_7] : memref<128x128xf32, #tpu.memory_space<vmem>>, vector<128x128xf32>
    %cst_8 = arith.constant dense<0.000000e+00> : vector<32x128xf32>
    %9 = tpu.matmul %7, %8, %cst_8 {dimension_numbers = #tpu.dot_dimension_numbers<[1], [0], [0], [1], [0, 0, 1, 1], [], []>} : vector<32x128xf32>, vector<128x128xf32>, vector<32x128xf32> -> vector<32x128xf32>
    %c0_9 = arith.constant 0 : index
    %c0_10 = arith.constant 0 : index
    %10 = vector.load %arg5[%c0_9, %c0_10] : memref<1x128xf32, #tpu.memory_space<vmem>>, vector<1x128xf32>
    %11 = vector.broadcast %10 : vector<1x128xf32> to vector<32x128xf32>
    %12 = arith.addf %9, %11 : vector<32x128xf32>
    %cst_11 = arith.constant 0.000000e+00 : f32
    %13 = vector.broadcast %cst_11 : f32 to vector<32x128xf32>
    %14 = arith.maximumf %12, %13 : vector<32x128xf32>
    %c0_12 = arith.constant 0 : index
    %c0_13 = arith.constant 0 : index
    %15 = vector.load %arg6[%c0_12, %c0_13] : memref<128x128xf32, #tpu.memory_space<vmem>>, vector<128x128xf32>
    %cst_14 = arith.constant dense<0.000000e+00> : vector<32x128xf32>
    %16 = tpu.matmul %14, %15, %cst_14 {dimension_numbers = #tpu.dot_dimension_numbers<[1], [0], [0], [1], [0, 0, 1, 1], [], []>} : vector<32x128xf32>, vector<128x128xf32>, vector<32x128xf32> -> vector<32x128xf32>
    %c0_15 = arith.constant 0 : index
    %c0_16 = arith.constant 0 : index
    %17 = vector.load %arg7[%c0_15, %c0_16] : memref<1x128xf32, #tpu.memory_space<vmem>>, vector<1x128xf32>
    %18 = vector.broadcast %17 : vector<1x128xf32> to vector<32x128xf32>
    %19 = arith.addf %16, %18 : vector<32x128xf32>
    %c0_17 = arith.constant 0 : index
    %c0_18 = arith.constant 0 : index
    %20 = vector.load %arg8[%c0_17, %c0_18] : memref<32x128xf32, #tpu.memory_space<vmem>>, vector<32x128xf32>
    tpu.vector_store %arg8[%c0_17, %c0_18], %19 {strides = array<i32>} : memref<32x128xf32, #tpu.memory_space<vmem>>, vector<32x128xf32>,
    return
  }
  func.func @transform_0(%arg0: i32) -> (i32, i32) {
    %c0_i32 = arith.constant 0 : i32
    %c0_i32_0 = arith.constant 0 : i32
    return %arg0, %c0_i32 : i32, i32
  }
  func.func @transform_1(%arg0: i32) -> (i32, i32) {
    %c0_i32 = arith.constant 0 : i32
    %c0_i32_0 = arith.constant 0 : i32
    %c0_i32_1 = arith.constant 0 : i32
    return %c0_i32, %c0_i32_0 : i32, i32
  }
  func.func @transform_2(%arg0: i32) -> (i32, i32) {
    %c0_i32 = arith.constant 0 : i32
    %c0_i32_0 = arith.constant 0 : i32
    %c0_i32_1 = arith.constant 0 : i32
    return %c0_i32, %c0_i32_0 : i32, i32
  }
  func.func @transform_3(%arg0: i32) -> (i32, i32) {
    %c0_i32 = arith.constant 0 : i32
    %c0_i32_0 = arith.constant 0 : i32
    %c0_i32_1 = arith.constant 0 : i32
    return %c0_i32, %c0_i32_0 : i32, i32
  }
  func.func @transform_4(%arg0: i32) -> (i32, i32) {
    %c0_i32 = arith.constant 0 : i32
    %c0_i32_0 = arith.constant 0 : i32
    %c0_i32_1 = arith.constant 0 : i32
    return %c0_i32, %c0_i32_0 : i32, i32
  }
  func.func @transform_5(%arg0: i32) -> (i32, i32) {
    %c0_i32 = arith.constant 0 : i32
    %c0_i32_0 = arith.constant 0 : i32
    %c0_i32_1 = arith.constant 0 : i32
    return %c0_i32, %c0_i32_0 : i32, i32
  }
  func.func @transform_6(%arg0: i32) -> (i32, i32) {
    %c0_i32 = arith.constant 0 : i32
    %c0_i32_0 = arith.constant 0 : i32
    %c0_i32_1 = arith.constant 0 : i32
    return %c0_i32, %c0_i32_0 : i32, i32
  }
  func.func @transform_7(%arg0: i32) -> (i32, i32) {
    %c0_i32 = arith.constant 0 : i32
    %c0_i32_0 = arith.constant 0 : i32
    return %arg0, %c0_i32 : i32, i32
  }
}

</mosaic_0001>

<llo_original>
// kernel: tpu_custom_call.1
$region0: #{tpu_custom_call.1}
  #allocation0 [shape = 'u32[]', space=smem, size = 0x4, offset = 0x4, fixed_abs, tag = 'smem constant byte address 0x4 - core index']
  #allocation1 [shape = 'u32[144,128]{1,0:T(1,128)}', space=vmem, size = 0x12000, scoped, tag = 'internal scratch']
  %s0 = inlined_call_operand.hbm [shape: f32[32,32], index: 0, kind: input, shape index: {}]
  %s1 = inlined_call_operand.hbm [shape: f32[32,128], index: 1, kind: input, shape index: {}]
  %s2 = inlined_call_operand.vmem [shape: f32[1,128], index: 2, kind: input, shape index: {}]
  %s3 = inlined_call_operand.hbm [shape: f32[128,128], index: 3, kind: input, shape index: {}]
  %s4 = inlined_call_operand.vmem [shape: f32[1,128], index: 4, kind: input, shape index: {}]
  %s5 = inlined_call_operand.hbm [shape: f32[128,128], index: 5, kind: input, shape index: {}]
  %s6 = inlined_call_operand.vmem [shape: f32[1,128], index: 6, kind: input, shape index: {}]
  %s7 = inlined_call_operand.hbm [shape: f32[32,128], index: 7, kind: output, shape index: {}]
  %s8 = sld [smem:[#allocation0]]
  $region54: #{tpu_custom_call.1} parent=0
    _
  %s10 = ssub.s32 1, %s8
  %s11 = scalar_select 0, %s10, %s8
  $region1: #{tpu_custom_call.1} parent=0
    #allocation2 [shape = 'u8[16384]{0}', space=vmem, size = 0x4000, scoped, tag = 'input window, operand 0, single buffered']
    #allocation3 [shape = 's32[1]{0}', space=sflag, size = 0x4, scoped, tag = 'scoped memory for tpu_custom_call.1']
    #allocation4 [shape = 's32[1]{0}', space=sflag, size = 0x4, scoped, tag = 'scoped memory for tpu_custom_call.1']
    #allocation5 [shape = 'u8[16384]{0}', space=vmem, size = 0x4000, scoped, tag = 'input window, operand 1, single buffered']
    #allocation6 [shape = 's32[1]{0}', space=sflag, size = 0x4, scoped, tag = 'scoped memory for tpu_custom_call.1']
    #allocation7 [shape = 'u8[65536]{0}', space=vmem, size = 0x10000, scoped, tag = 'input window, operand 3, single buffered']
    #allocation8 [shape = 'u8[65536]{0}', space=vmem, size = 0x10000, scoped, tag = 'input window, operand 5, single buffered']
    #allocation9 [shape = 's32[1]{0}', space=sflag, size = 0x4, scoped, tag = 'scoped memory for tpu_custom_call.1']
    #allocation10 [shape = 'u8[16384]{0}', space=vmem, size = 0x4000, scoped, tag = 'output window, operand 0, single buffered']
    %12 = vsyncpa [#allocation3], 0
    %13 = vsyncpa [#allocation6], 0
    %14 = vsyncpa [#allocation9], 0
    %15 = vsyncpa [#allocation4], 0
    // Predicated region
    $region2: #{tpu_custom_call.1} parent=1 // pred_check
      _
    $region3: #{tpu_custom_call.1} parent=1 // pred_check_branch
      %17 = sbr.rel (0) target = $region5
    $region4: #{tpu_custom_call.1} parent=1 // pred_region
      %s19 = ssub.s32 512, 512
      %20 = vsyncadd [#allocation3], %s19
      %s21 = sshll.u32 [#allocation2], 4
      %s22 = int_to_ptr.vmem [resolvable:$true] %s21
      %27 = dma.hbm_to_vmem [thread:$0]  %s0, 512, %s22, [#allocation3], 128, 128, 8
    $region5: #{tpu_custom_call.1} parent=1 // pred_fallthru
      _
    // Predicated region
    $region6: #{tpu_custom_call.1} parent=1 // pred_check
      _
    $region7: #{tpu_custom_call.1} parent=1 // pred_check_branch
      %29 = sbr.rel (0) target = $region9
    $region8: #{tpu_custom_call.1} parent=1 // pred_region
      %s31 = ssub.s32 512, 512
      %32 = vsyncadd [#allocation6], %s31
      %s33 = sshll.u32 [#allocation5], 4
      %s34 = int_to_ptr.vmem [resolvable:$true] %s33
      %39 = dma.hbm_to_vmem [thread:$0]  %s1, 512, %s34, [#allocation6], 128, 128, 8
    $region9: #{tpu_custom_call.1} parent=1 // pred_fallthru
      _
    // Predicated region
    $region10: #{tpu_custom_call.1} parent=1 // pred_check
      _
    $region11: #{tpu_custom_call.1} parent=1 // pred_check_branch
      %41 = sbr.rel (0) target = $region13
    $region12: #{tpu_custom_call.1} parent=1 // pred_region
      _
    $region13: #{tpu_custom_call.1} parent=1 // pred_fallthru
      _
    // Predicated region
    $region14: #{tpu_custom_call.1} parent=1 // pred_check
      _
    $region15: #{tpu_custom_call.1} parent=1 // pred_check_branch
      %43 = sbr.rel (0) target = $region17
    $region16: #{tpu_custom_call.1} parent=1 // pred_region
      %s45 = ssub.s32 2048, 2048
      %46 = vsyncadd [#allocation6], %s45
      %s47 = sshll.u32 [#allocation7], 4
      %s48 = int_to_ptr.vmem [resolvable:$true] %s47
      %53 = dma.hbm_to_vmem [thread:$0]  %s3, 2048, %s48, [#allocation6], 128, 128, 8
    $region17: #{tpu_custom_call.1} parent=1 // pred_fallthru
      _
    // Predicated region
    $region18: #{tpu_custom_call.1} parent=1 // pred_check
      _
    $region19: #{tpu_custom_call.1} parent=1 // pred_check_branch
      %55 = sbr.rel (0) target = $region21
    $region20: #{tpu_custom_call.1} parent=1 // pred_region
      _
    $region21: #{tpu_custom_call.1} parent=1 // pred_fallthru
      _
    // Predicated region
    $region22: #{tpu_custom_call.1} parent=1 // pred_check
      _
    $region23: #{tpu_custom_call.1} parent=1 // pred_check_branch
      %57 = sbr.rel (0) target = $region25
    $region24: #{tpu_custom_call.1} parent=1 // pred_region
      %s59 = ssub.s32 2048, 2048
      %60 = vsyncadd [#allocation9], %s59
      %s61 = sshll.u32 [#allocation8], 4
      %s62 = int_to_ptr.vmem [resolvable:$true] %s61
      %67 = dma.hbm_to_vmem [thread:$0]  %s5, 2048, %s62, [#allocation9], 128, 128, 8
    $region25: #{tpu_custom_call.1} parent=1 // pred_fallthru
      _
    // Predicated region
    $region26: #{tpu_custom_call.1} parent=1 // pred_check
      _
    $region27: #{tpu_custom_call.1} parent=1 // pred_check_branch
      %69 = sbr.rel (0) target = $region29
    $region28: #{tpu_custom_call.1} parent=1 // pred_region
      _
    $region29: #{tpu_custom_call.1} parent=1 // pred_fallthru
      _
    // Predicated region
    $region30: #{tpu_custom_call.1} parent=1 // pred_check
      _
    $region31: #{tpu_custom_call.1} parent=1 // pred_check_branch
      %71 = sbr.rel (0) target = $region33
    $region32: #{tpu_custom_call.1} parent=1 // pred_region
      %72 = dma.done [#allocation3], 512
    $region33: #{tpu_custom_call.1} parent=1 // pred_fallthru
      _
    // Predicated region
    $region34: #{tpu_custom_call.1} parent=1 // pred_check
      _
    $region35: #{tpu_custom_call.1} parent=1 // pred_check_branch
      %74 = sbr.rel (0) target = $region37
    $region36: #{tpu_custom_call.1} parent=1 // pred_region
      %75 = dma.done [#allocation6], 512
    $region37: #{tpu_custom_call.1} parent=1 // pred_fallthru
      _
    // Predicated region
    $region38: #{tpu_custom_call.1} parent=1 // pred_check
      _
    $region39: #{tpu_custom_call.1} parent=1 // pred_check_branch
      %77 = sbr.rel (0) target = $region41
    $region40: #{tpu_custom_call.1} parent=1 // pred_region
      %78 = dma.done [#allocation6], 2048
    $region41: #{tpu_custom_call.1} parent=1 // pred_fallthru
      _
    // Predicated region
    $region42: #{tpu_custom_call.1} parent=1 // pred_check
      _
    $region43: #{tpu_custom_call.1} parent=1 // pred_check_branch
      %80 = sbr.rel (0) target = $region45
    $region44: #{tpu_custom_call.1} parent=1 // pred_region
      %81 = dma.done [#allocation9], 2048
    $region45: #{tpu_custom_call.1} parent=1 // pred_fallthru
      _
    %v82 = vld [vmem:[#allocation2] sm:$0xff]
    %v83 = vld [vmem:[#allocation2 + $0x8] sm:$0xff]
    %v84 = vld [vmem:[#allocation2 + $0x10] sm:$0xff]
    %v85 = vld [vmem:[#allocation2 + $0x18] sm:$0xff]
    %v86 = vld [vmem:[#allocation5] sm:$0xff]
    %v87 = vld [vmem:[#allocation5 + $0x8] sm:$0xff]
    %v88 = vld [vmem:[#allocation5 + $0x10] sm:$0xff]
    %v89 = vld [vmem:[#allocation5 + $0x18] sm:$0xff]
    %v90 = vld [vmem:[%s2] sm:$0x1]
    %v92 = vlaneseq
    %v93 = vshrl.u32 %v92, 7
    %v94 = vsub.s32 0, %v93
    %v95 = vrot.slane %v90, %v94
    %vm97 = vcmask 261120
    %v99 = vsel %vm97, %v82, 0
    %v102 = vsel %vm97, %v83, 0
    %v105 = vsel %vm97, %v84, 0
    %v108 = vsel %vm97, %v85, 0
    %110 = vmatprep.subr.mxu0 0.0
    %111 = vmatpush1.msra.mxu0 %v86
    %112 = vmatprep.subr.mxu0 0.0
    %113 = vmatpush1.msra.mxu0 %v87
    %114 = vmatprep.subr.mxu0 0.0
    %115 = vmatpush1.msra.mxu0 %v88
    %116 = vmatprep.subr.mxu0 0.0
    %117 = vmatpush1.msra.mxu0 %v89
    %118 = vmatprep.subr.mxu0 0.0
    %119 = vmatpush1.msra.mxu0 0.0
    %120 = vmatprep.subr.mxu0 0.0
    %121 = vmatpush1.msra.mxu0 0.0
    %122 = vmatprep.subr.mxu0 0.0
    %123 = vmatpush1.msra.mxu0 0.0
    %124 = vmatprep.subr.mxu0 0.0
    %125 = vmatpush1.msra.mxu0 0.0
    %126 = vmatprep.subr.mxu0 0.0
    %127 = vmatpush1.msra.mxu0 0.0
    %128 = vmatprep.subr.mxu0 0.0
    %129 = vmatpush1.msra.mxu0 0.0
    %130 = vmatprep.subr.mxu0 0.0
    %131 = vmatpush1.msra.mxu0 0.0
    %132 = vmatprep.subr.mxu0 0.0
    %133 = vmatpush1.msra.mxu0 0.0
    %134 = vmatprep.subr.mxu0 0.0
    %135 = vmatpush1.msra.mxu0 0.0
    %136 = vmatprep.subr.mxu0 0.0
    %137 = vmatpush1.msra.mxu0 0.0
    %138 = vmatprep.subr.mxu0 0.0
    %139 = vmatpush1.msra.mxu0 0.0
    %140 = vmatprep.subr.mxu0 0.0
    %141 = vmatpush1.msra.mxu0 0.0
    %142 = vmatprep.subr.mxu0 0.0
    %143 = vmatpush1.msra.mxu0 0.0
    %144 = vmatprep.subr.mxu0 0.0
    %145 = vmatpush1.msra.mxu0 0.0
    %146 = vmatprep.subr.mxu0 0.0
    %147 = vmatpush1.msra.mxu0 0.0
    %148 = vmatprep.subr.mxu0 0.0
    %149 = vmatpush1.msra.mxu0 0.0
    %150 = vmatprep.subr.mxu0 0.0
    %151 = vmatpush1.msra.mxu0 0.0
    %152 = vmatprep.subr.mxu0 0.0
    %153 = vmatpush1.msra.mxu0 0.0
    %154 = vmatprep.subr.mxu0 0.0
    %155 = vmatpush1.msra.mxu0 0.0
    %156 = vmatprep.subr.mxu0 0.0
    %157 = vmatpush1.msra.mxu0 0.0
    %158 = vmatprep.subr.mxu0 0.0
    %159 = vmatpush1.msra.mxu0 0.0
    %160 = vmatprep.subr.mxu0 0.0
    %161 = vmatpush1.msra.mxu0 0.0
    %162 = vmatprep.subr.mxu0 0.0
    %163 = vmatpush1.msra.mxu0 0.0
    %164 = vmatprep.subr.mxu0 0.0
    %165 = vmatpush1.msra.mxu0 0.0
    %166 = vmatprep.subr.mxu0 0.0
    %167 = vmatpush1.msra.mxu0 0.0
    %168 = vmatprep.subr.mxu0 0.0
    %169 = vmatpush1.msra.mxu0 0.0
    %170 = vmatprep.subr.mxu0 0.0
    %171 = vmatpush1.msra.mxu0 0.0
    %172 = vmatprep.subr.mxu0 0.0
    %173 = vmatpush1.msra.mxu0 0.0
    %174 = vmatprep.mubr.f32.mxu0 0.0
    %175 = vmatmul.mubr.f32.gmra.mrb[0].mxu0 %v99
    %v176 = vpop.f32.mrb[0].mxu0
    %v177 = vadd.f32 %v95, %v176
    %v178 = vpop.f32.mrb[0].mxu0
    %179 = vmatprep.mubr.f32.mxu0 0.0
    %180 = vmatmul.mubr.f32.gmra.mrb[0].mxu0 %v102
    %v181 = vpop.f32.mrb[0].mxu0
    %v182 = vadd.f32 %v95, %v181
    %v183 = vpop.f32.mrb[0].mxu0
    %184 = vmatprep.mubr.f32.mxu0 0.0
    %185 = vmatmul.mubr.f32.gmra.mrb[0].mxu0 %v105
    %v186 = vpop.f32.mrb[0].mxu0
    %v187 = vadd.f32 %v95, %v186
    %v188 = vpop.f32.mrb[0].mxu0
    %189 = vmatprep.mubr.f32.mxu0 0.0
    %190 = vmatmul.mubr.f32.gmra.mrb[0].mxu0 %v108
    %v191 = vpop.f32.mrb[0].mxu0
    %v192 = vadd.f32 %v95, %v191
    %v193 = vpop.f32.mrb[0].mxu0
    %194 = vdwg.mxu0
    %v195 = vmax.f32 %v177, 0.0
    %v196 = vmax.f32 %v182, 0.0
    %v197 = vmax.f32 %v187, 0.0
    %v198 = vmax.f32 %v192, 0.0
    %v199 = vld [vmem:[#allocation7] sm:$0xff]
    %v200 = vld [vmem:[#allocation7 + $0x8] sm:$0xff]
    %v201 = vld [vmem:[#allocation7 + $0x10] sm:$0xff]
    %v202 = vld [vmem:[#allocation7 + $0x18] sm:$0xff]
    %v203 = vld [vmem:[#allocation7 + $0x20] sm:$0xff]
    %v204 = vld [vmem:[#allocation7 + $0x28] sm:$0xff]
    %v205 = vld [vmem:[#allocation7 + $0x30] sm:$0xff]
    %v206 = vld [vmem:[#allocation7 + $0x38] sm:$0xff]
    %v207 = vld [vmem:[#allocation7 + $0x40] sm:$0xff]
    %v208 = vld [vmem:[#allocation7 + $0x48] sm:$0xff]
    %v209 = vld [vmem:[#allocation7 + $0x50] sm:$0xff]
    %v210 = vld [vmem:[#allocation7 + $0x58] sm:$0xff]
    %v211 = vld [vmem:[#allocation7 + $0x60] sm:$0xff]
    %v212 = vld [vmem:[#allocation7 + $0x68] sm:$0xff]
    %v213 = vld [vmem:[#allocation7 + $0x70] sm:$0xff]
    %v214 = vld [vmem:[#allocation7 + $0x78] sm:$0xff]
    %v215 = vld [vmem:[%s4] sm:$0x1]
    %v217 = vlaneseq
    %v218 = vshrl.u32 %v217, 7
    %v219 = vsub.s32 0, %v218
    %v220 = vrot.slane %v215, %v219
    %222 = vmatprep.subr.mxu0 0.0
    %223 = vmatpush1.msra.mxu0 %v199
    %224 = vmatprep.subr.mxu0 0.0
    %225 = vmatpush1.msra.mxu0 %v200
    %226 = vmatprep.subr.mxu0 0.0
    %227 = vmatpush1.msra.mxu0 %v201
    %228 = vmatprep.subr.mxu0 0.0
    %229 = vmatpush1.msra.mxu0 %v202
    %230 = vmatprep.subr.mxu0 0.0
    %231 = vmatpush1.msra.mxu0 %v203
    %232 = vmatprep.subr.mxu0 0.0
    %233 = vmatpush1.msra.mxu0 %v204
    %234 = vmatprep.subr.mxu0 0.0
    %235 = vmatpush1.msra.mxu0 %v205
    %236 = vmatprep.subr.mxu0 0.0
    %237 = vmatpush1.msra.mxu0 %v206
    %238 = vmatprep.subr.mxu0 0.0
    %239 = vmatpush1.msra.mxu0 %v207
    %240 = vmatprep.subr.mxu0 0.0
    %241 = vmatpush1.msra.mxu0 %v208
    %242 = vmatprep.subr.mxu0 0.0
    %243 = vmatpush1.msra.mxu0 %v209
    %244 = vmatprep.subr.mxu0 0.0
    %245 = vmatpush1.msra.mxu0 %v210
    %246 = vmatprep.subr.mxu0 0.0
    %247 = vmatpush1.msra.mxu0 %v211
    %248 = vmatprep.subr.mxu0 0.0
    %249 = vmatpush1.msra.mxu0 %v212
    %250 = vmatprep.subr.mxu0 0.0
    %251 = vmatpush1.msra.mxu0 %v213
    %252 = vmatprep.subr.mxu0 0.0
    %253 = vmatpush1.msra.mxu0 %v214
    %254 = vmatprep.subr.mxu0 0.0
    %255 = vmatpush1.msra.mxu0 0.0
    %256 = vmatprep.subr.mxu0 0.0
    %257 = vmatpush1.msra.mxu0 0.0
    %258 = vmatprep.subr.mxu0 0.0
    %259 = vmatpush1.msra.mxu0 0.0
    %260 = vmatprep.subr.mxu0 0.0
    %261 = vmatpush1.msra.mxu0 0.0
    %262 = vmatprep.subr.mxu0 0.0
    %263 = vmatpush1.msra.mxu0 0.0
    %264 = vmatprep.subr.mxu0 0.0
    %265 = vmatpush1.msra.mxu0 0.0
    %266 = vmatprep.subr.mxu0 0.0
    %267 = vmatpush1.msra.mxu0 0.0
    %268 = vmatprep.subr.mxu0 0.0
    %269 = vmatpush1.msra.mxu0 0.0
    %270 = vmatprep.subr.mxu0 0.0
    %271 = vmatpush1.msra.mxu0 0.0
    %272 = vmatprep.subr.mxu0 0.0
    %273 = vmatpush1.msra.mxu0 0.0
    %274 = vmatprep.subr.mxu0 0.0
    %275 = vmatpush1.msra.mxu0 0.0
    %276 = vmatprep.subr.mxu0 0.0
    %277 = vmatpush1.msra.mxu0 0.0
    %278 = vmatprep.subr.mxu0 0.0
    %279 = vmatpush1.msra.mxu0 0.0
    %280 = vmatprep.subr.mxu0 0.0
    %281 = vmatpush1.msra.mxu0 0.0
    %282 = vmatprep.subr.mxu0 0.0
    %283 = vmatpush1.msra.mxu0 0.0
    %284 = vmatprep.subr.mxu0 0.0
    %285 = vmatpush1.msra.mxu0 0.0
    %286 = vmatprep.mubr.f32.mxu0 0.0
    %287 = vmatmul.mubr.f32.gmra.mrb[0].mxu0 %v195
    %v288 = vpop.f32.mrb[0].mxu0
    %v289 = vadd.f32 %v220, %v288
    %v290 = vpop.f32.mrb[0].mxu0
    %291 = vmatprep.mubr.f32.mxu0 0.0
    %292 = vmatmul.mubr.f32.gmra.mrb[0].mxu0 %v196
    %v293 = vpop.f32.mrb[0].mxu0
    %v294 = vadd.f32 %v220, %v293
    %v295 = vpop.f32.mrb[0].mxu0
    %296 = vmatprep.mubr.f32.mxu0 0.0
    %297 = vmatmul.mubr.f32.gmra.mrb[0].mxu0 %v197
    %v298 = vpop.f32.mrb[0].mxu0
    %v299 = vadd.f32 %v220, %v298
    %v300 = vpop.f32.mrb[0].mxu0
    %301 = vmatprep.mubr.f32.mxu0 0.0
    %302 = vmatmul.mubr.f32.gmra.mrb[0].mxu0 %v198
    %v303 = vpop.f32.mrb[0].mxu0
    %v304 = vadd.f32 %v220, %v303
    %v305 = vpop.f32.mrb[0].mxu0
    %306 = vdwg.mxu0
    %v307 = vmax.f32 %v289, 0.0
    %v308 = vmax.f32 %v294, 0.0
    %v309 = vmax.f32 %v299, 0.0
    %v310 = vmax.f32 %v304, 0.0
    %v311 = vld [vmem:[#allocation8] sm:$0xff]
    %v312 = vld [vmem:[#allocation8 + $0x8] sm:$0xff]
    %v313 = vld [vmem:[#allocation8 + $0x10] sm:$0xff]
    %v314 = vld [vmem:[#allocation8 + $0x18] sm:$0xff]
    %v315 = vld [vmem:[#allocation8 + $0x20] sm:$0xff]
    %v316 = vld [vmem:[#allocation8 + $0x28] sm:$0xff]
    %v317 = vld [vmem:[#allocation8 + $0x30] sm:$0xff]
    %v318 = vld [vmem:[#allocation8 + $0x38] sm:$0xff]
    %v319 = vld [vmem:[#allocation8 + $0x40] sm:$0xff]
    %v320 = vld [vmem:[#allocation8 + $0x48] sm:$0xff]
    %v321 = vld [vmem:[#allocation8 + $0x50] sm:$0xff]
    %v322 = vld [vmem:[#allocation8 + $0x58] sm:$0xff]
    %v323 = vld [vmem:[#allocation8 + $0x60] sm:$0xff]
    %v324 = vld [vmem:[#allocation8 + $0x68] sm:$0xff]
    %v325 = vld [vmem:[#allocation8 + $0x70] sm:$0xff]
    %v326 = vld [vmem:[#allocation8 + $0x78] sm:$0xff]
    %v327 = vld [vmem:[%s6] sm:$0x1]
    %v329 = vlaneseq
    %v330 = vshrl.u32 %v329, 7
    %v331 = vsub.s32 0, %v330
    %v332 = vrot.slane %v327, %v331
    %334 = vmatprep.subr.mxu0 0.0
    %335 = vmatpush1.msra.mxu0 %v311
    %336 = vmatprep.subr.mxu0 0.0
    %337 = vmatpush1.msra.mxu0 %v312
    %338 = vmatprep.subr.mxu0 0.0
    %339 = vmatpush1.msra.mxu0 %v313
    %340 = vmatprep.subr.mxu0 0.0
    %341 = vmatpush1.msra.mxu0 %v314
    %342 = vmatprep.subr.mxu0 0.0
    %343 = vmatpush1.msra.mxu0 %v315
    %344 = vmatprep.subr.mxu0 0.0
    %345 = vmatpush1.msra.mxu0 %v316
    %346 = vmatprep.subr.mxu0 0.0
    %347 = vmatpush1.msra.mxu0 %v317
    %348 = vmatprep.subr.mxu0 0.0
    %349 = vmatpush1.msra.mxu0 %v318
    %350 = vmatprep.subr.mxu0 0.0
    %351 = vmatpush1.msra.mxu0 %v319
    %352 = vmatprep.subr.mxu0 0.0
    %353 = vmatpush1.msra.mxu0 %v320
    %354 = vmatprep.subr.mxu0 0.0
    %355 = vmatpush1.msra.mxu0 %v321
    %356 = vmatprep.subr.mxu0 0.0
    %357 = vmatpush1.msra.mxu0 %v322
    %358 = vmatprep.subr.mxu0 0.0
    %359 = vmatpush1.msra.mxu0 %v323
    %360 = vmatprep.subr.mxu0 0.0
    %361 = vmatpush1.msra.mxu0 %v324
    %362 = vmatprep.subr.mxu0 0.0
    %363 = vmatpush1.msra.mxu0 %v325
    %364 = vmatprep.subr.mxu0 0.0
    %365 = vmatpush1.msra.mxu0 %v326
    %366 = vmatprep.subr.mxu0 0.0
    %367 = vmatpush1.msra.mxu0 0.0
    %368 = vmatprep.subr.mxu0 0.0
    %369 = vmatpush1.msra.mxu0 0.0
    %370 = vmatprep.subr.mxu0 0.0
    %371 = vmatpush1.msra.mxu0 0.0
    %372 = vmatprep.subr.mxu0 0.0
    %373 = vmatpush1.msra.mxu0 0.0
    %374 = vmatprep.subr.mxu0 0.0
    %375 = vmatpush1.msra.mxu0 0.0
    %376 = vmatprep.subr.mxu0 0.0
    %377 = vmatpush1.msra.mxu0 0.0
    %378 = vmatprep.subr.mxu0 0.0
    %379 = vmatpush1.msra.mxu0 0.0
    %380 = vmatprep.subr.mxu0 0.0
    %381 = vmatpush1.msra.mxu0 0.0
    %382 = vmatprep.subr.mxu0 0.0
    %383 = vmatpush1.msra.mxu0 0.0
    %384 = vmatprep.subr.mxu0 0.0
    %385 = vmatpush1.msra.mxu0 0.0
    %386 = vmatprep.subr.mxu0 0.0
    %387 = vmatpush1.msra.mxu0 0.0
    %388 = vmatprep.subr.mxu0 0.0
    %389 = vmatpush1.msra.mxu0 0.0
    %390 = vmatprep.subr.mxu0 0.0
    %391 = vmatpush1.msra.mxu0 0.0
    %392 = vmatprep.subr.mxu0 0.0
    %393 = vmatpush1.msra.mxu0 0.0
    %394 = vmatprep.subr.mxu0 0.0
    %395 = vmatpush1.msra.mxu0 0.0
    %396 = vmatprep.subr.mxu0 0.0
    %397 = vmatpush1.msra.mxu0 0.0
    %398 = vmatprep.mubr.f32.mxu0 0.0
    %399 = vmatmul.mubr.f32.gmra.mrb[0].mxu0 %v307
    %v400 = vpop.f32.mrb[0].mxu0
    %v401 = vadd.f32 %v332, %v400
    %v402 = vpop.f32.mrb[0].mxu0
    %403 = vmatprep.mubr.f32.mxu0 0.0
    %404 = vmatmul.mubr.f32.gmra.mrb[0].mxu0 %v308
    %v405 = vpop.f32.mrb[0].mxu0
    %v406 = vadd.f32 %v332, %v405
    %v407 = vpop.f32.mrb[0].mxu0
    %408 = vmatprep.mubr.f32.mxu0 0.0
    %409 = vmatmul.mubr.f32.gmra.mrb[0].mxu0 %v309
    %v410 = vpop.f32.mrb[0].mxu0
    %v411 = vadd.f32 %v332, %v410
    %v412 = vpop.f32.mrb[0].mxu0
    %413 = vmatprep.mubr.f32.mxu0 0.0
    %414 = vmatmul.mubr.f32.gmra.mrb[0].mxu0 %v310
    %v415 = vpop.f32.mrb[0].mxu0
    %v416 = vadd.f32 %v332, %v415
    %v417 = vpop.f32.mrb[0].mxu0
    %418 = vdwg.mxu0
    %419 = vst [vmem:[#allocation10] sm:$0xff] %v401
    %420 = vst [vmem:[#allocation10 + $0x8] sm:$0xff] %v406
    %421 = vst [vmem:[#allocation10 + $0x10] sm:$0xff] %v411
    %422 = vst [vmem:[#allocation10 + $0x18] sm:$0xff] %v416
    // Predicated region
    $region46: #{tpu_custom_call.1} parent=1 // pred_check
      _
    $region47: #{tpu_custom_call.1} parent=1 // pred_check_branch
      %424 = sbr.rel (0) target = $region49
    $region48: #{tpu_custom_call.1} parent=1 // pred_region
      %s426 = ssub.s32 512, 512
      %427 = vsyncadd [#allocation4], %s426
      %s428 = sshll.u32 [#allocation10], 4
      %s429 = int_to_ptr.vmem [resolvable:$true] %s428
      %434 = dma.vmem_to_hbm [thread:$0]  %s429, 512, %s7, [#allocation4], 128, 128, 8
    $region49: #{tpu_custom_call.1} parent=1 // pred_fallthru
      _
    // Predicated region
    $region50: #{tpu_custom_call.1} parent=1 // pred_check
      _
    $region51: #{tpu_custom_call.1} parent=1 // pred_check_branch
      %436 = sbr.rel (0) target = $region53
    $region52: #{tpu_custom_call.1} parent=1 // pred_region
      %437 = dma.done [#allocation4], 512
    $region53: #{tpu_custom_call.1} parent=1 // pred_fallthru
      _
    %438 = vsyncpa [#allocation3], 1
    %439 = vsyncpa [#allocation6], 1
    %440 = vsyncpa [#allocation9], 1
    %441 = vsyncpa [#allocation4], 1

// kernel: tpu_custom_call.1
$region0: #{tpu_custom_call.1}
  #allocation0 [shape = 'u32[]', space=smem, size = 0x4, offset = 0x4, fixed_abs, tag = 'smem constant byte address 0x4 - core index']
  #allocation1 [shape = 'u32[144,128]{1,0:T(1,128)}', space=vmem, size = 0x12000, scoped, tag = 'internal scratch']
  %s0 = inlined_call_operand.hbm [shape: f32[32,32], index: 0, kind: input, shape index: {}]
  %s1 = inlined_call_operand.hbm [shape: f32[32,128], index: 1, kind: input, shape index: {}]
  %s2 = inlined_call_operand.vmem [shape: f32[1,128], index: 2, kind: input, shape index: {}]
  %s3 = inlined_call_operand.hbm [shape: f32[128,128], index: 3, kind: input, shape index: {}]
  %s4 = inlined_call_operand.vmem [shape: f32[1,128], index: 4, kind: input, shape index: {}]
  %s5 = inlined_call_operand.hbm [shape: f32[128,128], index: 5, kind: input, shape index: {}]
  %s6 = inlined_call_operand.vmem [shape: f32[1,128], index: 6, kind: input, shape index: {}]
  %s7 = inlined_call_operand.hbm [shape: f32[32,128], index: 7, kind: output, shape index: {}]
  %s8 = sld [smem:[#allocation0]]
  $region54: #{tpu_custom_call.1} parent=0
    _
  %s10 = ssub.s32 1, %s8
  %s11 = scalar_select 0, %s10, %s8
  $region1: #{tpu_custom_call.1} parent=0
    #allocation2 [shape = 'u8[16384]{0}', space=vmem, size = 0x4000, scoped, tag = 'input window, operand 0, single buffered']
    #allocation3 [shape = 's32[1]{0}', space=sflag, size = 0x4, scoped, tag = 'scoped memory for tpu_custom_call.1']
    #allocation4 [shape = 's32[1]{0}', space=sflag, size = 0x4, scoped, tag = 'scoped memory for tpu_custom_call.1']
    #allocation5 [shape = 'u8[16384]{0}', space=vmem, size = 0x4000, scoped, tag = 'input window, operand 1, single buffered']
    #allocation6 [shape = 's32[1]{0}', space=sflag, size = 0x4, scoped, tag = 'scoped memory for tpu_custom_call.1']
    #allocation7 [shape = 'u8[65536]{0}', space=vmem, size = 0x10000, scoped, tag = 'input window, operand 3, single buffered']
    #allocation8 [shape = 'u8[65536]{0}', space=vmem, size = 0x10000, scoped, tag = 'input window, operand 5, single buffered']
    #allocation9 [shape = 's32[1]{0}', space=sflag, size = 0x4, scoped, tag = 'scoped memory for tpu_custom_call.1']
    #allocation10 [shape = 'u8[16384]{0}', space=vmem, size = 0x4000, scoped, tag = 'output window, operand 0, single buffered']
    %12 = vsyncpa [#allocation3], 0
    %13 = vsyncpa [#allocation6], 0
    %14 = vsyncpa [#allocation9], 0
    %15 = vsyncpa [#allocation4], 0
    // Predicated region
    $region2: #{tpu_custom_call.1} parent=1 // pred_check
      _
    $region3: #{tpu_custom_call.1} parent=1 // pred_check_branch
      %17 = sbr.rel (0) target = $region5
    $region4: #{tpu_custom_call.1} parent=1 // pred_region
      %s19 = ssub.s32 512, 512
      %20 = vsyncadd [#allocation3], %s19
      %s21 = sshll.u32 [#allocation2], 4
      %s22 = int_to_ptr.vmem [resolvable:$true] %s21
      %27 = dma.hbm_to_vmem [thread:$0]  %s0, 512, %s22, [#allocation3], 128, 128, 8
    $region5: #{tpu_custom_call.1} parent=1 // pred_fallthru
      _
    // Predicated region
    $region6: #{tpu_custom_call.1} parent=1 // pred_check
      _
    $region7: #{tpu_custom_call.1} parent=1 // pred_check_branch
      %29 = sbr.rel (0) target = $region9
    $region8: #{tpu_custom_call.1} parent=1 // pred_region
      %s31 = ssub.s32 512, 512
      %32 = vsyncadd [#allocation6], %s31
      %s33 = sshll.u32 [#allocation5], 4
      %s34 = int_to_ptr.vmem [resolvable:$true] %s33
      %39 = dma.hbm_to_vmem [thread:$0]  %s1, 512, %s34, [#allocation6], 128, 128, 8
    $region9: #{tpu_custom_call.1} parent=1 // pred_fallthru
      _
    // Predicated region
    $region10: #{tpu_custom_call.1} parent=1 // pred_check
      _
    $region11: #{tpu_custom_call.1} parent=1 // pred_check_branch
      %41 = sbr.rel (0) target = $region13
    $region12: #{tpu_custom_call.1} parent=1 // pred_region
      _
    $region13: #{tpu_custom_call.1} parent=1 // pred_fallthru
      _
    // Predicated region
    $region14: #{tpu_custom_call.1} parent=1 // pred_check
      _
    $region15: #{tpu_custom_call.1} parent=1 // pred_check_branch
      %43 = sbr.rel (0) target = $region17
    $region16: #{tpu_custom_call.1} parent=1 // pred_region
      %s45 = ssub.s32 2048, 2048
      %46 = vsyncadd [#allocation6], %s45
      %s47 = sshll.u32 [#allocation7], 4
      %s48 = int_to_ptr.vmem [resolvable:$true] %s47
      %53 = dma.hbm_to_vmem [thread:$0]  %s3, 2048, %s48, [#allocation6], 128, 128, 8
    $region17: #{tpu_custom_call.1} parent=1 // pred_fallthru
      _
    // Predicated region
    $region18: #{tpu_custom_call.1} parent=1 // pred_check
      _
    $region19: #{tpu_custom_call.1} parent=1 // pred_check_branch
      %55 = sbr.rel (0) target = $region21
    $region20: #{tpu_custom_call.1} parent=1 // pred_region
      _
    $region21: #{tpu_custom_call.1} parent=1 // pred_fallthru
      _
    // Predicated region
    $region22: #{tpu_custom_call.1} parent=1 // pred_check
      _
    $region23: #{tpu_custom_call.1} parent=1 // pred_check_branch
      %57 = sbr.rel (0) target = $region25
    $region24: #{tpu_custom_call.1} parent=1 // pred_region
      %s59 = ssub.s32 2048, 2048
      %60 = vsyncadd [#allocation9], %s59
      %s61 = sshll.u32 [#allocation8], 4
      %s62 = int_to_ptr.vmem [resolvable:$true] %s61
      %67 = dma.hbm_to_vmem [thread:$0]  %s5, 2048, %s62, [#allocation9], 128, 128, 8
    $region25: #{tpu_custom_call.1} parent=1 // pred_fallthru
      _
    // Predicated region
    $region26: #{tpu_custom_call.1} parent=1 // pred_check
      _
    $region27: #{tpu_custom_call.1} parent=1 // pred_check_branch
      %69 = sbr.rel (0) target = $region29
    $region28: #{tpu_custom_call.1} parent=1 // pred_region
      _
    $region29: #{tpu_custom_call.1} parent=1 // pred_fallthru
      _
    // Predicated region
    $region30: #{tpu_custom_call.1} parent=1 // pred_check
      _
    $region31: #{tpu_custom_call.1} parent=1 // pred_check_branch
      %71 = sbr.rel (0) target = $region33
    $region32: #{tpu_custom_call.1} parent=1 // pred_region
      %72 = dma.done [#allocation3], 512
    $region33: #{tpu_custom_call.1} parent=1 // pred_fallthru
      _
    // Predicated region
    $region34: #{tpu_custom_call.1} parent=1 // pred_check
      _
    $region35: #{tpu_custom_call.1} parent=1 // pred_check_branch
      %74 = sbr.rel (0) target = $region37
    $region36: #{tpu_custom_call.1} parent=1 // pred_region
      %75 = dma.done [#allocation6], 512
    $region37: #{tpu_custom_call.1} parent=1 // pred_fallthru
      _
    // Predicated region
    $region38: #{tpu_custom_call.1} parent=1 // pred_check
      _
    $region39: #{tpu_custom_call.1} parent=1 // pred_check_branch
      %77 = sbr.rel (0) target = $region41
    $region40: #{tpu_custom_call.1} parent=1 // pred_region
      %78 = dma.done [#allocation6], 2048
    $region41: #{tpu_custom_call.1} parent=1 // pred_fallthru
      _
    // Predicated region
    $region42: #{tpu_custom_call.1} parent=1 // pred_check
      _
    $region43: #{tpu_custom_call.1} parent=1 // pred_check_branch
      %80 = sbr.rel (0) target = $region45
    $region44: #{tpu_custom_call.1} parent=1 // pred_region
      %81 = dma.done [#allocation9], 2048
    $region45: #{tpu_custom_call.1} parent=1 // pred_fallthru
      _
    %v82 = vld [vmem:[#allocation2] sm:$0xff]
    %v83 = vld [vmem:[#allocation2 + $0x8] sm:$0xff]
    %v84 = vld [vmem:[#allocation2 + $0x10] sm:$0xff]
    %v85 = vld [vmem:[#allocation2 + $0x18] sm:$0xff]
    %v86 = vld [vmem:[#allocation5] sm:$0xff]
    %v87 = vld [vmem:[#allocation5 + $0x8] sm:$0xff]
    %v88 = vld [vmem:[#allocation5 + $0x10] sm:$0xff]
    %v89 = vld [vmem:[#allocation5 + $0x18] sm:$0xff]
    %v90 = vld [vmem:[%s2] sm:$0x1]
    %v92 = vlaneseq
    %v93 = vshrl.u32 %v92, 7
    %v94 = vsub.s32 0, %v93
    %v95 = vrot.slane %v90, %v94
    %vm97 = vcmask 261120
    %v99 = vsel %vm97, %v82, 0
    %v102 = vsel %vm97, %v83, 0
    %v105 = vsel %vm97, %v84, 0
    %v108 = vsel %vm97, %v85, 0
    %110 = vmatprep.subr.mxu0 0.0
    %111 = vmatpush1.msra.mxu0 %v86
    %112 = vmatprep.subr.mxu0 0.0
    %113 = vmatpush1.msra.mxu0 %v87
    %114 = vmatprep.subr.mxu0 0.0
    %115 = vmatpush1.msra.mxu0 %v88
    %116 = vmatprep.subr.mxu0 0.0
    %117 = vmatpush1.msra.mxu0 %v89
    %118 = vmatprep.subr.mxu0 0.0
    %119 = vmatpush1.msra.mxu0 0.0
    %120 = vmatprep.subr.mxu0 0.0
    %121 = vmatpush1.msra.mxu0 0.0
    %122 = vmatprep.subr.mxu0 0.0
    %123 = vmatpush1.msra.mxu0 0.0
    %124 = vmatprep.subr.mxu0 0.0
    %125 = vmatpush1.msra.mxu0 0.0
    %126 = vmatprep.subr.mxu0 0.0
    %127 = vmatpush1.msra.mxu0 0.0
    %128 = vmatprep.subr.mxu0 0.0
    %129 = vmatpush1.msra.mxu0 0.0
    %130 = vmatprep.subr.mxu0 0.0
    %131 = vmatpush1.msra.mxu0 0.0
    %132 = vmatprep.subr.mxu0 0.0
    %133 = vmatpush1.msra.mxu0 0.0
    %134 = vmatprep.subr.mxu0 0.0
    %135 = vmatpush1.msra.mxu0 0.0
    %136 = vmatprep.subr.mxu0 0.0
    %137 = vmatpush1.msra.mxu0 0.0
    %138 = vmatprep.subr.mxu0 0.0
    %139 = vmatpush1.msra.mxu0 0.0
    %140 = vmatprep.subr.mxu0 0.0
    %141 = vmatpush1.msra.mxu0 0.0
    %142 = vmatprep.subr.mxu0 0.0
    %143 = vmatpush1.msra.mxu0 0.0
    %144 = vmatprep.subr.mxu0 0.0
    %145 = vmatpush1.msra.mxu0 0.0
    %146 = vmatprep.subr.mxu0 0.0
    %147 = vmatpush1.msra.mxu0 0.0
    %148 = vmatprep.subr.mxu0 0.0
    %149 = vmatpush1.msra.mxu0 0.0
    %150 = vmatprep.subr.mxu0 0.0
    %151 = vmatpush1.msra.mxu0 0.0
    %152 = vmatprep.subr.mxu0 0.0
    %153 = vmatpush1.msra.mxu0 0.0
    %154 = vmatprep.subr.mxu0 0.0
    %155 = vmatpush1.msra.mxu0 0.0
    %156 = vmatprep.subr.mxu0 0.0
    %157 = vmatpush1.msra.mxu0 0.0
    %158 = vmatprep.subr.mxu0 0.0
    %159 = vmatpush1.msra.mxu0 0.0
    %160 = vmatprep.subr.mxu0 0.0
    %161 = vmatpush1.msra.mxu0 0.0
    %162 = vmatprep.subr.mxu0 0.0
    %163 = vmatpush1.msra.mxu0 0.0
    %164 = vmatprep.subr.mxu0 0.0
    %165 = vmatpush1.msra.mxu0 0.0
    %166 = vmatprep.subr.mxu0 0.0
    %167 = vmatpush1.msra.mxu0 0.0
    %168 = vmatprep.subr.mxu0 0.0
    %169 = vmatpush1.msra.mxu0 0.0
    %170 = vmatprep.subr.mxu0 0.0
    %171 = vmatpush1.msra.mxu0 0.0
    %172 = vmatprep.subr.mxu0 0.0
    %173 = vmatpush1.msra.mxu0 0.0
    %174 = vmatprep.mubr.f32.mxu0 0.0
    %175 = vmatmul.mubr.f32.gmra.mrb[0].mxu0 %v99
    %v176 = vpop.f32.mrb[0].mxu0
    %v177 = vadd.f32 %v95, %v176
    %v178 = vpop.f32.mrb[0].mxu0
    %179 = vmatprep.mubr.f32.mxu0 0.0
    %180 = vmatmul.mubr.f32.gmra.mrb[0].mxu0 %v102
    %v181 = vpop.f32.mrb[0].mxu0
    %v182 = vadd.f32 %v95, %v181
    %v183 = vpop.f32.mrb[0].mxu0
    %184 = vmatprep.mubr.f32.mxu0 0.0
    %185 = vmatmul.mubr.f32.gmra.mrb[0].mxu0 %v105
    %v186 = vpop.f32.mrb[0].mxu0
    %v187 = vadd.f32 %v95, %v186
    %v188 = vpop.f32.mrb[0].mxu0
    %189 = vmatprep.mubr.f32.mxu0 0.0
    %190 = vmatmul.mubr.f32.gmra.mrb[0].mxu0 %v108
    %v191 = vpop.f32.mrb[0].mxu0
    %v192 = vadd.f32 %v95, %v191
    %v193 = vpop.f32.mrb[0].mxu0
    %194 = vdwg.mxu0
    %v195 = vmax.f32 %v177, 0.0
    %v196 = vmax.f32 %v182, 0.0
    %v197 = vmax.f32 %v187, 0.0
    %v198 = vmax.f32 %v192, 0.0
    %v199 = vld [vmem:[#allocation7] sm:$0xff]
    %v200 = vld [vmem:[#allocation7 + $0x8] sm:$0xff]
    %v201 = vld [vmem:[#allocation7 + $0x10] sm:$0xff]
    %v202 = vld [vmem:[#allocation7 + $0x18] sm:$0xff]
    %v203 = vld [vmem:[#allocation7 + $0x20] sm:$0xff]
    %v204 = vld [vmem:[#allocation7 + $0x28] sm:$0xff]
    %v205 = vld [vmem:[#allocation7 + $0x30] sm:$0xff]
    %v206 = vld [vmem:[#allocation7 + $0x38] sm:$0xff]
    %v207 = vld [vmem:[#allocation7 + $0x40] sm:$0xff]
    %v208 = vld [vmem:[#allocation7 + $0x48] sm:$0xff]
    %v209 = vld [vmem:[#allocation7 + $0x50] sm:$0xff]
    %v210 = vld [vmem:[#allocation7 + $0x58] sm:$0xff]
    %v211 = vld [vmem:[#allocation7 + $0x60] sm:$0xff]
    %v212 = vld [vmem:[#allocation7 + $0x68] sm:$0xff]
    %v213 = vld [vmem:[#allocation7 + $0x70] sm:$0xff]
    %v214 = vld [vmem:[#allocation7 + $0x78] sm:$0xff]
    %v215 = vld [vmem:[%s4] sm:$0x1]
    %v217 = vlaneseq
    %v218 = vshrl.u32 %v217, 7
    %v219 = vsub.s32 0, %v218
    %v220 = vrot.slane %v215, %v219
    %222 = vmatprep.subr.mxu0 0.0
    %223 = vmatpush1.msra.mxu0 %v199
    %224 = vmatprep.subr.mxu0 0.0
    %225 = vmatpush1.msra.mxu0 %v200
    %226 = vmatprep.subr.mxu0 0.0
    %227 = vmatpush1.msra.mxu0 %v201
    %228 = vmatprep.subr.mxu0 0.0
    %229 = vmatpush1.msra.mxu0 %v202
    %230 = vmatprep.subr.mxu0 0.0
    %231 = vmatpush1.msra.mxu0 %v203
    %232 = vmatprep.subr.mxu0 0.0
    %233 = vmatpush1.msra.mxu0 %v204
    %234 = vmatprep.subr.mxu0 0.0
    %235 = vmatpush1.msra.mxu0 %v205
    %236 = vmatprep.subr.mxu0 0.0
    %237 = vmatpush1.msra.mxu0 %v206
    %238 = vmatprep.subr.mxu0 0.0
    %239 = vmatpush1.msra.mxu0 %v207
    %240 = vmatprep.subr.mxu0 0.0
    %241 = vmatpush1.msra.mxu0 %v208
    %242 = vmatprep.subr.mxu0 0.0
    %243 = vmatpush1.msra.mxu0 %v209
    %244 = vmatprep.subr.mxu0 0.0
    %245 = vmatpush1.msra.mxu0 %v210
    %246 = vmatprep.subr.mxu0 0.0
    %247 = vmatpush1.msra.mxu0 %v211
    %248 = vmatprep.subr.mxu0 0.0
    %249 = vmatpush1.msra.mxu0 %v212
    %250 = vmatprep.subr.mxu0 0.0
    %251 = vmatpush1.msra.mxu0 %v213
    %252 = vmatprep.subr.mxu0 0.0
    %253 = vmatpush1.msra.mxu0 %v214
    %254 = vmatprep.subr.mxu0 0.0
    %255 = vmatpush1.msra.mxu0 0.0
    %256 = vmatprep.subr.mxu0 0.0
    %257 = vmatpush1.msra.mxu0 0.0
    %258 = vmatprep.subr.mxu0 0.0
    %259 = vmatpush1.msra.mxu0 0.0
    %260 = vmatprep.subr.mxu0 0.0
    %261 = vmatpush1.msra.mxu0 0.0
    %262 = vmatprep.subr.mxu0 0.0
    %263 = vmatpush1.msra.mxu0 0.0
    %264 = vmatprep.subr.mxu0 0.0
    %265 = vmatpush1.msra.mxu0 0.0
    %266 = vmatprep.subr.mxu0 0.0
    %267 = vmatpush1.msra.mxu0 0.0
    %268 = vmatprep.subr.mxu0 0.0
    %269 = vmatpush1.msra.mxu0 0.0
    %270 = vmatprep.subr.mxu0 0.0
    %271 = vmatpush1.msra.mxu0 0.0
    %272 = vmatprep.subr.mxu0 0.0
    %273 = vmatpush1.msra.mxu0 0.0
    %274 = vmatprep.subr.mxu0 0.0
    %275 = vmatpush1.msra.mxu0 0.0
    %276 = vmatprep.subr.mxu0 0.0
    %277 = vmatpush1.msra.mxu0 0.0
    %278 = vmatprep.subr.mxu0 0.0
    %279 = vmatpush1.msra.mxu0 0.0
    %280 = vmatprep.subr.mxu0 0.0
    %281 = vmatpush1.msra.mxu0 0.0
    %282 = vmatprep.subr.mxu0 0.0
    %283 = vmatpush1.msra.mxu0 0.0
    %284 = vmatprep.subr.mxu0 0.0
    %285 = vmatpush1.msra.mxu0 0.0
    %286 = vmatprep.mubr.f32.mxu0 0.0
    %287 = vmatmul.mubr.f32.gmra.mrb[0].mxu0 %v195
    %v288 = vpop.f32.mrb[0].mxu0
    %v289 = vadd.f32 %v220, %v288
    %v290 = vpop.f32.mrb[0].mxu0
    %291 = vmatprep.mubr.f32.mxu0 0.0
    %292 = vmatmul.mubr.f32.gmra.mrb[0].mxu0 %v196
    %v293 = vpop.f32.mrb[0].mxu0
    %v294 = vadd.f32 %v220, %v293
    %v295 = vpop.f32.mrb[0].mxu0
    %296 = vmatprep.mubr.f32.mxu0 0.0
    %297 = vmatmul.mubr.f32.gmra.mrb[0].mxu0 %v197
    %v298 = vpop.f32.mrb[0].mxu0
    %v299 = vadd.f32 %v220, %v298
    %v300 = vpop.f32.mrb[0].mxu0
    %301 = vmatprep.mubr.f32.mxu0 0.0
    %302 = vmatmul.mubr.f32.gmra.mrb[0].mxu0 %v198
    %v303 = vpop.f32.mrb[0].mxu0
    %v304 = vadd.f32 %v220, %v303
    %v305 = vpop.f32.mrb[0].mxu0
    %306 = vdwg.mxu0
    %v307 = vmax.f32 %v289, 0.0
    %v308 = vmax.f32 %v294, 0.0
    %v309 = vmax.f32 %v299, 0.0
    %v310 = vmax.f32 %v304, 0.0
    %v311 = vld [vmem:[#allocation8] sm:$0xff]
    %v312 = vld [vmem:[#allocation8 + $0x8] sm:$0xff]
    %v313 = vld [vmem:[#allocation8 + $0x10] sm:$0xff]
    %v314 = vld [vmem:[#allocation8 + $0x18] sm:$0xff]
    %v315 = vld [vmem:[#allocation8 + $0x20] sm:$0xff]
    %v316 = vld [vmem:[#allocation8 + $0x28] sm:$0xff]
    %v317 = vld [vmem:[#allocation8 + $0x30] sm:$0xff]
    %v318 = vld [vmem:[#allocation8 + $0x38] sm:$0xff]
    %v319 = vld [vmem:[#allocation8 + $0x40] sm:$0xff]
    %v320 = vld [vmem:[#allocation8 + $0x48] sm:$0xff]
    %v321 = vld [vmem:[#allocation8 + $0x50] sm:$0xff]
    %v322 = vld [vmem:[#allocation8 + $0x58] sm:$0xff]
    %v323 = vld [vmem:[#allocation8 + $0x60] sm:$0xff]
    %v324 = vld [vmem:[#allocation8 + $0x68] sm:$0xff]
    %v325 = vld [vmem:[#allocation8 + $0x70] sm:$0xff]
    %v326 = vld [vmem:[#allocation8 + $0x78] sm:$0xff]
    %v327 = vld [vmem:[%s6] sm:$0x1]
    %v329 = vlaneseq
    %v330 = vshrl.u32 %v329, 7
    %v331 = vsub.s32 0, %v330
    %v332 = vrot.slane %v327, %v331
    %334 = vmatprep.subr.mxu0 0.0
    %335 = vmatpush1.msra.mxu0 %v311
    %336 = vmatprep.subr.mxu0 0.0
    %337 = vmatpush1.msra.mxu0 %v312
    %338 = vmatprep.subr.mxu0 0.0
    %339 = vmatpush1.msra.mxu0 %v313
    %340 = vmatprep.subr.mxu0 0.0
    %341 = vmatpush1.msra.mxu0 %v314
    %342 = vmatprep.subr.mxu0 0.0
    %343 = vmatpush1.msra.mxu0 %v315
    %344 = vmatprep.subr.mxu0 0.0
    %345 = vmatpush1.msra.mxu0 %v316
    %346 = vmatprep.subr.mxu0 0.0
    %347 = vmatpush1.msra.mxu0 %v317
    %348 = vmatprep.subr.mxu0 0.0
    %349 = vmatpush1.msra.mxu0 %v318
    %350 = vmatprep.subr.mxu0 0.0
    %351 = vmatpush1.msra.mxu0 %v319
    %352 = vmatprep.subr.mxu0 0.0
    %353 = vmatpush1.msra.mxu0 %v320
    %354 = vmatprep.subr.mxu0 0.0
    %355 = vmatpush1.msra.mxu0 %v321
    %356 = vmatprep.subr.mxu0 0.0
    %357 = vmatpush1.msra.mxu0 %v322
    %358 = vmatprep.subr.mxu0 0.0
    %359 = vmatpush1.msra.mxu0 %v323
    %360 = vmatprep.subr.mxu0 0.0
    %361 = vmatpush1.msra.mxu0 %v324
    %362 = vmatprep.subr.mxu0 0.0
    %363 = vmatpush1.msra.mxu0 %v325
    %364 = vmatprep.subr.mxu0 0.0
    %365 = vmatpush1.msra.mxu0 %v326
    %366 = vmatprep.subr.mxu0 0.0
    %367 = vmatpush1.msra.mxu0 0.0
    %368 = vmatprep.subr.mxu0 0.0
    %369 = vmatpush1.msra.mxu0 0.0
    %370 = vmatprep.subr.mxu0 0.0
    %371 = vmatpush1.msra.mxu0 0.0
    %372 = vmatprep.subr.mxu0 0.0
    %373 = vmatpush1.msra.mxu0 0.0
    %374 = vmatprep.subr.mxu0 0.0
    %375 = vmatpush1.msra.mxu0 0.0
    %376 = vmatprep.subr.mxu0 0.0
    %377 = vmatpush1.msra.mxu0 0.0
    %378 = vmatprep.subr.mxu0 0.0
    %379 = vmatpush1.msra.mxu0 0.0
    %380 = vmatprep.subr.mxu0 0.0
    %381 = vmatpush1.msra.mxu0 0.0
    %382 = vmatprep.subr.mxu0 0.0
    %383 = vmatpush1.msra.mxu0 0.0
    %384 = vmatprep.subr.mxu0 0.0
    %385 = vmatpush1.msra.mxu0 0.0
    %386 = vmatprep.subr.mxu0 0.0
    %387 = vmatpush1.msra.mxu0 0.0
    %388 = vmatprep.subr.mxu0 0.0
    %389 = vmatpush1.msra.mxu0 0.0
    %390 = vmatprep.subr.mxu0 0.0
    %391 = vmatpush1.msra.mxu0 0.0
    %392 = vmatprep.subr.mxu0 0.0
    %393 = vmatpush1.msra.mxu0 0.0
    %394 = vmatprep.subr.mxu0 0.0
    %395 = vmatpush1.msra.mxu0 0.0
    %396 = vmatprep.subr.mxu0 0.0
    %397 = vmatpush1.msra.mxu0 0.0
    %398 = vmatprep.mubr.f32.mxu0 0.0
    %399 = vmatmul.mubr.f32.gmra.mrb[0].mxu0 %v307
    %v400 = vpop.f32.mrb[0].mxu0
    %v401 = vadd.f32 %v332, %v400
    %v402 = vpop.f32.mrb[0].mxu0
    %403 = vmatprep.mubr.f32.mxu0 0.0
    %404 = vmatmul.mubr.f32.gmra.mrb[0].mxu0 %v308
    %v405 = vpop.f32.mrb[0].mxu0
    %v406 = vadd.f32 %v332, %v405
    %v407 = vpop.f32.mrb[0].mxu0
    %408 = vmatprep.mubr.f32.mxu0 0.0
    %409 = vmatmul.mubr.f32.gmra.mrb[0].mxu0 %v309
    %v410 = vpop.f32.mrb[0].mxu0
    %v411 = vadd.f32 %v332, %v410
    %v412 = vpop.f32.mrb[0].mxu0
    %413 = vmatprep.mubr.f32.mxu0 0.0
    %414 = vmatmul.mubr.f32.gmra.mrb[0].mxu0 %v310
    %v415 = vpop.f32.mrb[0].mxu0
    %v416 = vadd.f32 %v332, %v415
    %v417 = vpop.f32.mrb[0].mxu0
    %418 = vdwg.mxu0
    %419 = vst [vmem:[#allocation10] sm:$0xff] %v401
    %420 = vst [vmem:[#allocation10 + $0x8] sm:$0xff] %v406
    %421 = vst [vmem:[#allocation10 + $0x10] sm:$0xff] %v411
    %422 = vst [vmem:[#allocation10 + $0x18] sm:$0xff] %v416
    // Predicated region
    $region46: #{tpu_custom_call.1} parent=1 // pred_check
      _
    $region47: #{tpu_custom_call.1} parent=1 // pred_check_branch
      %424 = sbr.rel (0) target = $region49
    $region48: #{tpu_custom_call.1} parent=1 // pred_region
      %s426 = ssub.s32 512, 512
      %427 = vsyncadd [#allocation4], %s426
      %s428 = sshll.u32 [#allocation10], 4
      %s429 = int_to_ptr.vmem [resolvable:$true] %s428
      %434 = dma.vmem_to_hbm [thread:$0]  %s429, 512, %s7, [#allocation4], 128, 128, 8
    $region49: #{tpu_custom_call.1} parent=1 // pred_fallthru
      _
    // Predicated region
    $region50: #{tpu_custom_call.1} parent=1 // pred_check
      _
    $region51: #{tpu_custom_call.1} parent=1 // pred_check_branch
      %436 = sbr.rel (0) target = $region53
    $region52: #{tpu_custom_call.1} parent=1 // pred_region
      %437 = dma.done [#allocation4], 512
    $region53: #{tpu_custom_call.1} parent=1 // pred_fallthru
      _
    %438 = vsyncpa [#allocation3], 1
    %439 = vsyncpa [#allocation6], 1
    %440 = vsyncpa [#allocation9], 1
    %441 = vsyncpa [#allocation4], 1

</llo_original>
